<compile_context>
chip_gen: v5e
topology: v5e:2x2
jax: 0.10.0
libtpu: 0.0.40
codegen_flags: <defaults>
</compile_context>

<pallas_src>
import functools

import jax
import jax.numpy as jnp
import numpy as np
from jax.experimental import pallas as pl
from jax.experimental.pallas import tpu as pltpu

MFCC_DIM = 13       # mfcc_dim (the module hard-codes eye(13))
SPECTRAL_DIM = 24   # spectral_dim
SAMPLE_SIZE = 10    # sample_size (module default)
STATS_WIDTH = 256   # lane-dense output slab width (>= D*D + D, multiple of 128)


# ---------------------------------------------------------------------------
# Constant matrices (numpy, computed once per (SD, D) / (D, W))
# ---------------------------------------------------------------------------
@functools.lru_cache(maxsize=None)
def _dct_constants(sd, d):
    """Truncated idct / dct matrices matching torch_dct (norm=None).

    dct:  X_k = 2 * sum_m x_m cos(pi*(2m+1)k/(2N))
    idct: x_m = X_0/(2N) + (1/N) * sum_{k>=1} X_k cos(pi*(2m+1)k/(2N))   (exact inverse)
    """
    k = np.arange(sd, dtype=np.float64)
    m = np.arange(sd, dtype=np.float64)
    dct_mat = 2.0 * np.cos(np.pi * (2.0 * m[None, :] + 1.0) * k[:, None] / (2.0 * sd))
    idct_mat = np.cos(np.pi * (2.0 * m[:, None] + 1.0) * k[None, :] / (2.0 * sd)) / sd
    idct_mat[:, 0] = 1.0 / (2.0 * sd)
    # zero-padding before idct folded in: only the first d input coeffs matter.
    idctT = np.ascontiguousarray(idct_mat[:, :d].T).astype(np.float32)   # [d, sd]
    # narrow after dct folded in: only the first d outputs are kept.
    dctT = np.ascontiguousarray(dct_mat[:d, :].T).astype(np.float32)     # [sd, d]
    return idctT, dctT


@functools.lru_cache(maxsize=None)
def _outer_constants(d, w):
    """0/1 expansion matrices so that (y@E_L)*(y@E_R + mask) packs y_i*y_j and y_i."""
    d2 = d * d
    assert w >= d2 + d
    el = np.zeros((d, w), np.float32)
    er = np.zeros((d, w), np.float32)
    mask = np.zeros((1, w), np.float32)
    for i in range(d):
        for j in range(d):
            el[i, i * d + j] = 1.0     # left[:, i*d+j]  = y_i
            er[j, i * d + j] = 1.0     # right[:, i*d+j] = y_j
        el[i, d2 + i] = 1.0            # left[:, d2+i]   = y_i
        mask[0, d2 + i] = 1.0          # (right + mask)[:, d2+i] = 1  -> f = y_i
    return el, er, mask


# ---------------------------------------------------------------------------
# Pallas kernel
# ---------------------------------------------------------------------------
def _spectral_attack_kernel(x_ref, idctT_ref, dctT_ref, noise_ref,
                            el_ref, er_ref, mask_ref, stats_ref):
    # x_ref:     [S, TN, D]   Monte-Carlo samples, sample index outermost
    # idctT_ref: [D, SD]      truncated idct matrix (zero-pad folded in)
    # dctT_ref:  [SD, D]      truncated dct matrix (narrow folded in)
    # noise_ref: [1, SD]      exp(noise_root)
    # el/er:     [D, W]       outer-product expansion matrices
    # mask_ref:  [1, W]       1.0 in the "mean" lanes (D*D .. D*D+D-1)
    # stats_ref: [TN, W]      lanes 0..D*D-1: E[y_i y_j], lanes D*D..D*D+D-1: E[y_i]
    S, TN, D = x_ref.shape
    W = stats_ref.shape[-1]

    x = x_ref[...].reshape(S * TN, D)                                       # free merge
    # attack: (pad) -> idct -> exp -> +noise -> log -> dct -> (narrow)
    log_spec = jnp.dot(x, idctT_ref[...], preferred_element_type=jnp.float32)   # [R, SD]
    att_log = jnp.log(jnp.exp(log_spec) + noise_ref[...])
    y = jnp.dot(att_log, dctT_ref[...], preferred_element_type=jnp.float32)     # [R, D]

    # lane-dense [R, W] feature slab: y_i*y_j in lanes 0..168, y_i in lanes 169..181
    left = jnp.dot(y, el_ref[...], preferred_element_type=jnp.float32)          # [R, W]
    right = jnp.dot(y, er_ref[...], preferred_element_type=jnp.float32)         # [R, W]
    f = left * (right + mask_ref[...])

    # average over the Monte-Carlo sample axis: reduction over the leading
    # (non-tiled) axis = S-1 elementwise adds of [TN, W] slabs, no XLU/relayout.
    stats_ref[...] = jnp.mean(f.reshape(S, TN, W), axis=0)


def _choose_tiling(n, cap=256):
    """tile_n (multiple of 8, <= cap) and grid size; keep >=2 steps when possible (v7x)."""
    def rup(v, m):
        return ((v + m - 1) // m) * m
    if rup(n, 8) <= cap:
        tile = rup((n + 1) // 2, 8) if n > 8 else 8
    else:
        tile = cap
    grid = -(-n // tile)
    return tile, grid


def attack_mean_cov(samples, noise_root):
    """samples: [NS, NF, S, D] f32, noise_root: [SD] f32.
    Returns (mean [NS,NF,D], cov+0.01*I [NS,NF,D,D])."""
    NS, NF, S, D = samples.shape
    SD = noise_root.shape[0]
    N = NS * NF
    D2 = D * D
    W = STATS_WIDTH

    idctT_np, dctT_np = _dct_constants(SD, D)
    el_np, er_np, mask_np = _outer_constants(D, W)
    noise = jnp.exp(noise_root.astype(jnp.float32))[None, :]                 # [1, SD]

    # groups are contiguous blocks of S rows of the raw-reshaped sample buffer
    x = samples.reshape(N, S, D).astype(jnp.float32)

    tile_n, grid_n = _choose_tiling(N)
    Np = tile_n * grid_n
    if Np != N:
        x = jnp.concatenate([x, jnp.zeros((Np - N, S, D), jnp.float32)], axis=0)
    x3 = jnp.transpose(x, (1, 0, 2))                                         # [S, Np, D]

    stats = pl.pallas_call(
        _spectral_attack_kernel,
        out_shape=jax.ShapeDtypeStruct((Np, W), jnp.float32),
        grid_spec=pltpu.PrefetchScalarGridSpec(
            num_scalar_prefetch=0,
            grid=(grid_n,),
            in_specs=[pl.BlockSpec((S, tile_n, D), lambda i: (0, i, 0)),
                      pl.BlockSpec((D, SD), lambda i: (0, 0)),
                      pl.BlockSpec((SD, D), lambda i: (0, 0)),
                      pl.BlockSpec((1, SD), lambda i: (0, 0)),
                      pl.BlockSpec((D, W), lambda i: (0, 0)),
                      pl.BlockSpec((D, W), lambda i: (0, 0)),
                      pl.BlockSpec((1, W), lambda i: (0, 0))],
            out_specs=pl.BlockSpec((tile_n, W), lambda i: (i, 0))),
        compiler_params=pltpu.CompilerParams(
            dimension_semantics=("parallel",),
            vmem_limit_bytes=48 * 1024 * 1024),
    )(x3, jnp.asarray(idctT_np), jnp.asarray(dctT_np), noise,
      jnp.asarray(el_np), jnp.asarray(er_np), jnp.asarray(mask_np))

    stats = stats[:N]
    sq_mean = stats[:, :D2].reshape(N, D, D)
    mean = stats[:, D2:D2 + D]
    cov = sq_mean - mean[:, :, None] * mean[:, None, :] + 0.01 * jnp.eye(D, dtype=jnp.float32)
    return mean.reshape(NS, NF, D), cov.reshape(NS, NF, D, D)


# ---------------------------------------------------------------------------
# Forward pass (module semantics up to the external trained model)
# ---------------------------------------------------------------------------
def spectral_attack_montecarlo_forward(noise_root, p_means, p_covariances,
                                       q_means, q_covariances, num_phones_mask, key):
    """JAX equivalent of Spectral_attack_montecarlo.forward (up to the external trained model)."""
    S = SAMPLE_SIZE
    NS, NF, D = p_means.shape
    kp, kq = jax.random.split(key)
    p_samples = jax.random.multivariate_normal(
        kp, p_means, p_covariances, shape=(S, NS, NF), method='cholesky').astype(jnp.float32)
    q_samples = jax.random.multivariate_normal(
        kq, q_means, q_covariances, shape=(S, NS, NF), method='cholesky').astype(jnp.float32)
    # torch.reshape semantics (raw reshape, not a permute), exactly as in the module
    ps = jnp.reshape(p_samples, (NS, NF, S, D))
    qs = jnp.reshape(q_samples, (NS, NF, S, D))

    p_mean_att, p_cov_noised = attack_mean_cov(ps, noise_root)
    q_mean_att, q_cov_noised = attack_mean_cov(qs, noise_root)

    # TODO(synk): torch.load(trained_model_path), trained_model(...) and the final
    # clamp(0, 6) depend on an external checkpoint and have no Pallas equivalent;
    # we return the attacked statistics that would be fed to that model.
    del num_phones_mask
    return p_mean_att, p_cov_noised, q_mean_att, q_cov_noised


# ---------------------------------------------------------------------------
# Pure-JAX reference (independent route via numerical inverse of the DCT matrix)
# ---------------------------------------------------------------------------
def _reference_attack_mean_cov(samples, noise_root):
    NS, NF, S, D = samples.shape
    SD = noise_root.shape[0]
    k = np.arange(SD, dtype=np.float64)
    m = np.arange(SD, dtype=np.float64)
    dct_full = 2.0 * np.cos(np.pi * (2.0 * m[None, :] + 1.0) * k[:, None] / (2.0 * SD))
    idct_full = np.linalg.inv(dct_full)
    pad = jnp.zeros((NS, NF, S, SD - D), jnp.float32)
    padded = jnp.concatenate([samples, pad], axis=3)
    log_spec = jnp.einsum('...k,nk->...n', padded, jnp.asarray(idct_full, jnp.float32))
    att_log = jnp.log(jnp.exp(log_spec) + jnp.exp(noise_root))
    out = jnp.einsum('...n,kn->...k', att_log, jnp.asarray(dct_full, jnp.float32))[..., :D]
    mean = jnp.mean(out, axis=-2)
    sq = jnp.mean(out[..., :, None] * out[..., None, :], axis=-3)
    cov = sq - mean[..., :, None] * mean[..., None, :]
    return mean, cov + 0.01 * jnp.eye(D, dtype=jnp.float32)


if __name__ == "__main__":
    key = jax.random.PRNGKey(0)
    NS, NF, D = 2, 8, MFCC_DIM
    k1, k2, k3, k4, k5 = jax.random.split(key, 5)

    def make_cov(k):
        a = 0.1 * jax.random.normal(k, (NS, NF, D, D), jnp.float32)
        return jnp.einsum('...ij,...kj->...ik', a, a) + 0.5 * jnp.eye(D, dtype=jnp.float32)

    p_means = 0.1 * jax.random.normal(k1, (NS, NF, D), jnp.float32)
    q_means = 0.1 * jax.random.normal(k2, (NS, NF, D), jnp.float32)
    p_covs = make_cov(k3)
    q_covs = make_cov(k4)
    num_phones_mask = jnp.ones((NS, NF), jnp.float32)

    # deterministic parameter init (module's self.noise_root = Parameter(init_root))
    noise_root = jnp.linspace(-3.0, -1.0, SPECTRAL_DIM).astype(jnp.float32)

    outs = spectral_attack_montecarlo_forward(
        noise_root, p_means, p_covs, q_means, q_covs, num_phones_mask, k5)
    outs = jax.block_until_ready(outs)

    # sanity-check the Pallas kernel against a pure-JAX reference (p branch)
    kp, _ = jax.random.split(k5)
    p_samples = jax.random.multivariate_normal(
        kp, p_means, p_covs, shape=(SAMPLE_SIZE, NS, NF), method='cholesky').astype(jnp.float32)
    ps = jnp.reshape(p_samples, (NS, NF, SAMPLE_SIZE, D))
    ref_mean, ref_cov = _reference_attack_mean_cov(ps, noise_root)
    np.testing.assert_allclose(np.asarray(outs[0]), np.asarray(ref_mean), rtol=1e-3, atol=1e-3)
    np.testing.assert_allclose(np.asarray(outs[1]), np.asarray(ref_cov), rtol=1e-3, atol=1e-3)

    print("KERNEL_OK")
</pallas_src>

<mosaic_0001>
module attributes {stable_mosaic.version = 11 : i64} {
  func.func @_spectral_attack_kernel(%arg0: i32, %arg1: memref<10x8x13xf32, #tpu.memory_space<vmem>>, %arg2: memref<13x24xf32, #tpu.memory_space<vmem>>, %arg3: memref<24x13xf32, #tpu.memory_space<vmem>>, %arg4: memref<1x24xf32, #tpu.memory_space<vmem>>, %arg5: memref<13x256xf32, #tpu.memory_space<vmem>>, %arg6: memref<13x256xf32, #tpu.memory_space<vmem>>, %arg7: memref<1x256xf32, #tpu.memory_space<vmem>>, %arg8: memref<8x256xf32, #tpu.memory_space<vmem>>) attributes {dimension_semantics = [#tpu.dimension_semantics<parallel>], iteration_bounds = array<i64: 2>, scalar_prefetch = 0 : i64, scratch_operands = 0 : i64, tpu.core_type = #tpu.core_type<tc>, window_params = [{transform_indices = @transform_0, window_bounds = array<i64: 10, 8, 13>}, {pipeline_mode = #tpu.pipeline_mode<synchronous>, transform_indices = @transform_1, window_bounds = array<i64: 13, 24>}, {pipeline_mode = #tpu.pipeline_mode<synchronous>, transform_indices = @transform_2, window_bounds = array<i64: 24, 13>}, {pipeline_mode = #tpu.pipeline_mode<synchronous>, transform_indices = @transform_3, window_bounds = array<i64: 1, 24>}, {pipeline_mode = #tpu.pipeline_mode<synchronous>, transform_indices = @transform_4, window_bounds = array<i64: 13, 256>}, {pipeline_mode = #tpu.pipeline_mode<synchronous>, transform_indices = @transform_5, window_bounds = array<i64: 13, 256>}, {pipeline_mode = #tpu.pipeline_mode<synchronous>, transform_indices = @transform_6, window_bounds = array<i64: 1, 256>}, {transform_indices = @transform_7, window_bounds = array<i64: 8, 256>}]} {
    %c0 = arith.constant 0 : index
    %c0_0 = arith.constant 0 : index
    %c0_1 = arith.constant 0 : index
    %0 = vector.load %arg1[%c0, %c0_0, %c0_1] : memref<10x8x13xf32, #tpu.memory_space<vmem>>, vector<10x8x13xf32>
    %1 = vector.shape_cast %0 : vector<10x8x13xf32> to vector<80x13xf32>
    %c0_2 = arith.constant 0 : index
    %c0_3 = arith.constant 0 : index
    %2 = vector.load %arg2[%c0_2, %c0_3] : memref<13x24xf32, #tpu.memory_space<vmem>>, vector<13x24xf32>
    %cst = arith.constant dense<0.000000e+00> : vector<80x24xf32>
    %3 = tpu.matmul %1, %2, %cst {dimension_numbers = #tpu.dot_dimension_numbers<[1], [0], [0], [1], [0, 0, 1, 1], [], []>} : vector<80x13xf32>, vector<13x24xf32>, vector<80x24xf32> -> vector<80x24xf32>
    %4 = math.exp %3 : vector<80x24xf32>
    %c0_4 = arith.constant 0 : index
    %c0_5 = arith.constant 0 : index
    %5 = vector.load %arg4[%c0_4, %c0_5] : memref<1x24xf32, #tpu.memory_space<vmem>>, vector<1x24xf32>
    %6 = vector.broadcast %5 : vector<1x24xf32> to vector<80x24xf32>
    %7 = arith.addf %4, %6 : vector<80x24xf32>
    %8 = math.log %7 : vector<80x24xf32>
    %c0_6 = arith.constant 0 : index
    %c0_7 = arith.constant 0 : index
    %9 = vector.load %arg3[%c0_6, %c0_7] : memref<24x13xf32, #tpu.memory_space<vmem>>, vector<24x13xf32>
    %cst_8 = arith.constant dense<0.000000e+00> : vector<80x13xf32>
    %10 = tpu.matmul %8, %9, %cst_8 {dimension_numbers = #tpu.dot_dimension_numbers<[1], [0], [0], [1], [0, 0, 1, 1], [], []>} : vector<80x24xf32>, vector<24x13xf32>, vector<80x13xf32> -> vector<80x13xf32>
    %c0_9 = arith.constant 0 : index
    %c0_10 = arith.constant 0 : index
    %11 = vector.load %arg5[%c0_9, %c0_10] : memref<13x256xf32, #tpu.memory_space<vmem>>, vector<13x256xf32>
    %cst_11 = arith.constant dense<0.000000e+00> : vector<80x256xf32>
    %12 = tpu.matmul %10, %11, %cst_11 {dimension_numbers = #tpu.dot_dimension_numbers<[1], [0], [0], [1], [0, 0, 1, 1], [], []>} : vector<80x13xf32>, vector<13x256xf32>, vector<80x256xf32> -> vector<80x256xf32>
    %c0_12 = arith.constant 0 : index
    %c0_13 = arith.constant 0 : index
    %13 = vector.load %arg6[%c0_12, %c0_13] : memref<13x256xf32, #tpu.memory_space<vmem>>, vector<13x256xf32>
    %cst_14 = arith.constant dense<0.000000e+00> : vector<80x256xf32>
    %14 = tpu.matmul %10, %13, %cst_14 {dimension_numbers = #tpu.dot_dimension_numbers<[1], [0], [0], [1], [0, 0, 1, 1], [], []>} : vector<80x13xf32>, vector<13x256xf32>, vector<80x256xf32> -> vector<80x256xf32>
    %c0_15 = arith.constant 0 : index
    %c0_16 = arith.constant 0 : index
    %15 = vector.load %arg7[%c0_15, %c0_16] : memref<1x256xf32, #tpu.memory_space<vmem>>, vector<1x256xf32>
    %16 = vector.broadcast %15 : vector<1x256xf32> to vector<80x256xf32>
    %17 = arith.addf %14, %16 : vector<80x256xf32>
    %18 = arith.mulf %12, %17 : vector<80x256xf32>
    %19 = vector.shape_cast %18 : vector<80x256xf32> to vector<10x8x256xf32>
    %cst_17 = arith.constant dense<0.000000e+00> : vector<8x256xf32>
    %20 = vector.multi_reduction <add>, %19, %cst_17 [0] : vector<10x8x256xf32> to vector<8x256xf32>
    %cst_18 = arith.constant 1.000000e+01 : f32
    %21 = vector.broadcast %cst_18 : f32 to vector<8x256xf32>
    %22 = arith.divf %20, %21 : vector<8x256xf32>
    %c0_19 = arith.constant 0 : index
    %c0_20 = arith.constant 0 : index
    %23 = vector.load %arg8[%c0_19, %c0_20] : memref<8x256xf32, #tpu.memory_space<vmem>>, vector<8x256xf32>
    tpu.vector_store %arg8[%c0_19, %c0_20], %22 {strides = array<i32>} : memref<8x256xf32, #tpu.memory_space<vmem>>, vector<8x256xf32>,
    return
  }
  func.func @transform_0(%arg0: i32) -> (i32, i32, i32) {
    %c0_i32 = arith.constant 0 : i32
    %c0_i32_0 = arith.constant 0 : i32
    %c0_i32_1 = arith.constant 0 : i32
    return %c0_i32, %arg0, %c0_i32_0 : i32, i32, i32
  }
  func.func @transform_1(%arg0: i32) -> (i32, i32) {
    %c0_i32 = arith.constant 0 : i32
    %c0_i32_0 = arith.constant 0 : i32
    %c0_i32_1 = arith.constant 0 : i32
    return %c0_i32, %c0_i32_0 : i32, i32
  }
  func.func @transform_2(%arg0: i32) -> (i32, i32) {
    %c0_i32 = arith.constant 0 : i32
    %c0_i32_0 = arith.constant 0 : i32
    %c0_i32_1 = arith.constant 0 : i32
    return %c0_i32, %c0_i32_0 : i32, i32
  }
  func.func @transform_3(%arg0: i32) -> (i32, i32) {
    %c0_i32 = arith.constant 0 : i32
    %c0_i32_0 = arith.constant 0 : i32
    %c0_i32_1 = arith.constant 0 : i32
    return %c0_i32, %c0_i32_0 : i32, i32
  }
  func.func @transform_4(%arg0: i32) -> (i32, i32) {
    %c0_i32 = arith.constant 0 : i32
    %c0_i32_0 = arith.constant 0 : i32
    %c0_i32_1 = arith.constant 0 : i32
    return %c0_i32, %c0_i32_0 : i32, i32
  }
  func.func @transform_5(%arg0: i32) -> (i32, i32) {
    %c0_i32 = arith.constant 0 : i32
    %c0_i32_0 = arith.constant 0 : i32
    %c0_i32_1 = arith.constant 0 : i32
    return %c0_i32, %c0_i32_0 : i32, i32
  }
  func.func @transform_6(%arg0: i32) -> (i32, i32) {
    %c0_i32 = arith.constant 0 : i32
    %c0_i32_0 = arith.constant 0 : i32
    %c0_i32_1 = arith.constant 0 : i32
    return %c0_i32, %c0_i32_0 : i32, i32
  }
  func.func @transform_7(%arg0: i32) -> (i32, i32) {
    %c0_i32 = arith.constant 0 : i32
    %c0_i32_0 = arith.constant 0 : i32
    return %arg0, %c0_i32 : i32, i32
  }
}

</mosaic_0001>

<llo_original>
// kernel: tpu_custom_call.1
$region0: #{tpu_custom_call.1}
  #allocation0 [shape = 'u32[]', space=smem, size = 0x4, offset = 0x4, fixed_abs, tag = 'smem constant byte address 0x4 - core index']
  #allocation1 [shape = 'u32[72,128]{1,0:T(1,128)}', space=vmem, size = 0x9000, scoped, tag = 'internal scratch']
  %s0 = inlined_call_operand.hbm [shape: f32[10,16,13], index: 0, kind: input, shape index: {}]
  %s1 = inlined_call_operand.hbm [shape: f32[13,24], index: 1, kind: input, shape index: {}]
  %s2 = inlined_call_operand.vmem [shape: f32[24,13], index: 2, kind: input, shape index: {}]
  %s3 = inlined_call_operand.vmem [shape: f32[1,24], index: 3, kind: input, shape index: {}]
  %s4 = inlined_call_operand.vmem [shape: f32[13,256], index: 4, kind: input, shape index: {}]
  %s5 = inlined_call_operand.hbm [shape: f32[13,256], index: 5, kind: input, shape index: {}]
  %s6 = inlined_call_operand.vmem [shape: f32[1,256], index: 6, kind: input, shape index: {}]
  %s7 = inlined_call_operand.hbm [shape: f32[16,256], index: 7, kind: output, shape index: {}]
  %s8 = sld [smem:[#allocation0]]
  $region73: #{tpu_custom_call.1} parent=0
    _
  %s10 = ssub.s32 1, %s8
  %s11 = scalar_select 0, %s10, %s8
  $region1: #{tpu_custom_call.1} parent=0
    #allocation2 [shape = 'u8[81920]{0}', space=vmem, size = 0x14000, scoped, tag = 'input window, operand 0']
    #allocation3 [shape = 's32[2]{0}', space=sflag, size = 0x8, scoped, tag = 'scoped memory for tpu_custom_call.1']
    #allocation4 [shape = 's32[2]{0}', space=sflag, size = 0x8, scoped, tag = 'scoped memory for tpu_custom_call.1']
    #allocation5 [shape = 'u8[8192]{0}', space=vmem, size = 0x2000, scoped, tag = 'input window, operand 1, single buffered']
    #allocation6 [shape = 's32[1]{0}', space=sflag, size = 0x4, scoped, tag = 'scoped memory for tpu_custom_call.1']
    #allocation7 [shape = 'u8[16384]{0}', space=vmem, size = 0x4000, scoped, tag = 'input window, operand 5, single buffered']
    #allocation8 [shape = 'u8[16384]{0}', space=vmem, size = 0x4000, scoped, tag = 'output window, operand 0']
    %12 = vsyncpa [#allocation3], 0
    %s13 = scalar_lea.sflag [#allocation3], 1
    %14 = vsyncpa %s13, 0
    %15 = vsyncpa [#allocation6], 0
    %16 = vsyncpa [#allocation4], 0
    %s17 = scalar_lea.sflag [#allocation4], 1
    %18 = vsyncpa %s17, 0
    loop: start=0, step=1, limit=4
    $region2: #{tpu_custom_call.1} parent=1 // loop_pre_header
      _
    $region3: #{tpu_custom_call.1} parent=1 // loop_header
      %s20 = sphi 0, %s24
      %p21 = scmp.ge.s32.totalorder %s20, 4
      %s30 = sphi 0, %s32
      %s33 = sphi 0, %s30
      %s34 = sphi 0, %s33
      %s50 = sphi 0, %s34
      %s54 = sphi 0, %s54
      %s56 = sphi 0, %s54
      %s57 = sphi 0, %s56
      %s71 = sphi 0, %s57
      %s75 = sphi 0, %s75
      %s77 = sphi 0, %s75
      %s78 = sphi 0, %s77
      %s92 = sphi 0, %s78
      %s96 = sphi 0, %s96
      %s98 = sphi 0, %s96
      %s99 = sphi 0, %s98
      %s113 = sphi 0, %s99
      %s117 = sphi 0, %s117
      %s119 = sphi 0, %s117
      %s120 = sphi 0, %s119
      %s134 = sphi 0, %s120
      %s138 = sphi 0, %s138
      %s140 = sphi 0, %s138
      %s141 = sphi 0, %s140
      %s155 = sphi 0, %s141
      %s159 = sphi 0, %s159
      %s161 = sphi 0, %s159
      %s162 = sphi 0, %s161
      %s176 = sphi 0, %s162
      %s182 = sphi 0, %s184
      %s185 = sphi 0, %s182
      %s186 = sphi 0, %s185
      %s202 = sphi 0, %s186
    $region4: #{tpu_custom_call.1} parent=1 // loop_header_branch
      %23 = sbr.rel (%p21) target = $region8
    $region5: #{tpu_custom_call.1} parent=1 // loop_body
      %s25 = ssub.s32 %s20, 1
      %s26 = ssub.s32 %s20, 2
      %s27 = sadd.s32 %s20, 1
      %s28 = ssub.s32 %s20, %s27
      %p29 = scmp.eq.s32.totalorder %s28, 0
      %s31 = sadd.s32 %s30, 1
      %s32 = scalar_select %p29, %s30, %s31
      %p35 = pneg %p29
      %p36 = scmp.eq.s32.totalorder %s20, 1
      %p37 = por %p35, %p36
      %p38 = scmp.ne.s32.totalorder %s30, %s33
      %p39 = scmp.eq.s32.totalorder %s20, 0
      %p40 = por %p38, %p39
      %p41 = scmp.ne.s32.totalorder %s30, %s33
      %p42 = scmp.eq.s32.totalorder %s25, 1
      %p43 = por %p41, %p42
      %p44 = scmp.ne.s32.totalorder %s33, %s34
      %p45 = scmp.eq.s32.totalorder %s25, 0
      %p46 = por %p44, %p45
      %p47 = scmp.ne.s32.totalorder %s33, %s34
      %p48 = scmp.eq.s32.totalorder %s26, 1
      %p49 = por %p47, %p48
      %p51 = scmp.ne.s32.totalorder %s34, %s50
      %p52 = scmp.eq.s32.totalorder %s26, 0
      %p53 = por %p51, %p52
      %s55 = sadd.s32 %s54, 1
      %p58 = scmp.eq.s32.totalorder %s20, 1
      %p59 = scmp.ne.s32.totalorder %s54, %s56
      %p60 = scmp.eq.s32.totalorder %s20, 0
      %p61 = por %p59, %p60
      %p62 = scmp.ne.s32.totalorder %s54, %s56
      %p63 = scmp.eq.s32.totalorder %s25, 1
      %p64 = por %p62, %p63
      %p65 = scmp.ne.s32.totalorder %s56, %s57
      %p66 = scmp.eq.s32.totalorder %s25, 0
      %p67 = por %p65, %p66
      %p68 = scmp.ne.s32.totalorder %s56, %s57
      %p69 = scmp.eq.s32.totalorder %s26, 1
      %p70 = por %p68, %p69
      %p72 = scmp.ne.s32.totalorder %s57, %s71
      %p73 = scmp.eq.s32.totalorder %s26, 0
      %p74 = por %p72, %p73
      %s76 = sadd.s32 %s75, 1
      %p79 = scmp.eq.s32.totalorder %s20, 1
      %p80 = scmp.ne.s32.totalorder %s75, %s77
      %p81 = scmp.eq.s32.totalorder %s20, 0
      %p82 = por %p80, %p81
      %p83 = scmp.ne.s32.totalorder %s75, %s77
      %p84 = scmp.eq.s32.totalorder %s25, 1
      %p85 = por %p83, %p84
      %p86 = scmp.ne.s32.totalorder %s77, %s78
      %p87 = scmp.eq.s32.totalorder %s25, 0
      %p88 = por %p86, %p87
      %p89 = scmp.ne.s32.totalorder %s77, %s78
      %p90 = scmp.eq.s32.totalorder %s26, 1
      %p91 = por %p89, %p90
      %p93 = scmp.ne.s32.totalorder %s78, %s92
      %p94 = scmp.eq.s32.totalorder %s26, 0
      %p95 = por %p93, %p94
      %s97 = sadd.s32 %s96, 1
      %p100 = scmp.eq.s32.totalorder %s20, 1
      %p101 = scmp.ne.s32.totalorder %s96, %s98
      %p102 = scmp.eq.s32.totalorder %s20, 0
      %p103 = por %p101, %p102
      %p104 = scmp.ne.s32.totalorder %s96, %s98
      %p105 = scmp.eq.s32.totalorder %s25, 1
      %p106 = por %p104, %p105
      %p107 = scmp.ne.s32.totalorder %s98, %s99
      %p108 = scmp.eq.s32.totalorder %s25, 0
      %p109 = por %p107, %p108
      %p110 = scmp.ne.s32.totalorder %s98, %s99
      %p111 = scmp.eq.s32.totalorder %s26, 1
      %p112 = por %p110, %p111
      %p114 = scmp.ne.s32.totalorder %s99, %s113
      %p115 = scmp.eq.s32.totalorder %s26, 0
      %p116 = por %p114, %p115
      %s118 = sadd.s32 %s117, 1
      %p121 = scmp.eq.s32.totalorder %s20, 1
      %p122 = scmp.ne.s32.totalorder %s117, %s119
      %p123 = scmp.eq.s32.totalorder %s20, 0
      %p124 = por %p122, %p123
      %p125 = scmp.ne.s32.totalorder %s117, %s119
      %p126 = scmp.eq.s32.totalorder %s25, 1
      %p127 = por %p125, %p126
      %p128 = scmp.ne.s32.totalorder %s119, %s120
      %p129 = scmp.eq.s32.totalorder %s25, 0
      %p130 = por %p128, %p129
      %p131 = scmp.ne.s32.totalorder %s119, %s120
      %p132 = scmp.eq.s32.totalorder %s26, 1
      %p133 = por %p131, %p132
      %p135 = scmp.ne.s32.totalorder %s120, %s134
      %p136 = scmp.eq.s32.totalorder %s26, 0
      %p137 = por %p135, %p136
      %s139 = sadd.s32 %s138, 1
      %p142 = scmp.eq.s32.totalorder %s20, 1
      %p143 = scmp.ne.s32.totalorder %s138, %s140
      %p144 = scmp.eq.s32.totalorder %s20, 0
      %p145 = por %p143, %p144
      %p146 = scmp.ne.s32.totalorder %s138, %s140
      %p147 = scmp.eq.s32.totalorder %s25, 1
      %p148 = por %p146, %p147
      %p149 = scmp.ne.s32.totalorder %s140, %s141
      %p150 = scmp.eq.s32.totalorder %s25, 0
      %p151 = por %p149, %p150
      %p152 = scmp.ne.s32.totalorder %s140, %s141
      %p153 = scmp.eq.s32.totalorder %s26, 1
      %p154 = por %p152, %p153
      %p156 = scmp.ne.s32.totalorder %s141, %s155
      %p157 = scmp.eq.s32.totalorder %s26, 0
      %p158 = por %p156, %p157
      %s160 = sadd.s32 %s159, 1
      %p163 = scmp.eq.s32.totalorder %s20, 1
      %p164 = scmp.ne.s32.totalorder %s159, %s161
      %p165 = scmp.eq.s32.totalorder %s20, 0
      %p166 = por %p164, %p165
      %p167 = scmp.ne.s32.totalorder %s159, %s161
      %p168 = scmp.eq.s32.totalorder %s25, 1
      %p169 = por %p167, %p168
      %p170 = scmp.ne.s32.totalorder %s161, %s162
      %p171 = scmp.eq.s32.totalorder %s25, 0
      %p172 = por %p170, %p171
      %p173 = scmp.ne.s32.totalorder %s161, %s162
      %p174 = scmp.eq.s32.totalorder %s26, 1
      %p175 = por %p173, %p174
      %p177 = scmp.ne.s32.totalorder %s162, %s176
      %p178 = scmp.eq.s32.totalorder %s26, 0
      %p179 = por %p177, %p178
      %s180 = ssub.s32 %s20, %s27
      %p181 = scmp.eq.s32.totalorder %s180, 0
      %s183 = sadd.s32 %s182, 1
      %s184 = scalar_select %p181, %s182, %s183
      %p187 = pneg %p181
      %p188 = scmp.eq.s32.totalorder %s20, 1
      %p189 = por %p187, %p188
      %p190 = scmp.ne.s32.totalorder %s182, %s185
      %p191 = scmp.eq.s32.totalorder %s20, 0
      %p192 = por %p190, %p191
      %p193 = scmp.ne.s32.totalorder %s182, %s185
      %p194 = scmp.eq.s32.totalorder %s25, 1
      %p195 = por %p193, %p194
      %p196 = scmp.ne.s32.totalorder %s185, %s186
      %p197 = scmp.eq.s32.totalorder %s25, 0
      %p198 = por %p196, %p197
      %p199 = scmp.ne.s32.totalorder %s185, %s186
      %p200 = scmp.eq.s32.totalorder %s26, 1
      %p201 = por %p199, %p200
      %p203 = scmp.ne.s32.totalorder %s186, %s202
      %p204 = scmp.eq.s32.totalorder %s26, 0
      %p205 = por %p203, %p204
      %p206 = scmp.le.s32.totalorder 1, %s20
      %p207 = scmp.lt.s32.totalorder %s20, 3
      %p208 = pnand %p206, %p207
      %p209 = pneg %p208
      // Predicated region
      $region9: #{tpu_custom_call.1} parent=5 // pred_check
        _
      $region10: #{tpu_custom_call.1} parent=5 // pred_check_branch
        %211 = sbr.rel (%p208) target = $region12
      $region11: #{tpu_custom_call.1} parent=5 // pred_region
        %s212 = ssub.s32 %s20, 1
        // Predicated region
        $region13: #{tpu_custom_call.1} parent=11 // pred_check
          %p213 = pneg %p67
        $region14: #{tpu_custom_call.1} parent=11 // pred_check_branch
          %215 = sbr.rel (%p213) target = $region16
        $region15: #{tpu_custom_call.1} parent=11 // pred_region
          %217 = vsyncadd [#allocation6], 0
          %s218 = sshll.u32 %s1, 4
          %s219 = int_to_ptr.hbm [resolvable:$true] %s218
          %s220 = sshll.u32 [#allocation5], 4
          %s221 = int_to_ptr.vmem [resolvable:$true] %s220
          %226 = dma.hbm_to_vmem [thread:$0]  %s219, 256, %s221, [#allocation6], 128, 128, 8
        $region16: #{tpu_custom_call.1} parent=11 // pred_fallthru
          _
        // Predicated region
        $region17: #{tpu_custom_call.1} parent=11 // pred_check
          %p227 = pneg %p88
        $region18: #{tpu_custom_call.1} parent=11 // pred_check_branch
          %229 = sbr.rel (%p227) target = $region20
        $region19: #{tpu_custom_call.1} parent=11 // pred_region
          _
        $region20: #{tpu_custom_call.1} parent=11 // pred_fallthru
          _
        // Predicated region
        $region21: #{tpu_custom_call.1} parent=11 // pred_check
          %p230 = pneg %p109
        $region22: #{tpu_custom_call.1} parent=11 // pred_check_branch
          %232 = sbr.rel (%p230) target = $region24
        $region23: #{tpu_custom_call.1} parent=11 // pred_region
          _
        $region24: #{tpu_custom_call.1} parent=11 // pred_fallthru
          _
        // Predicated region
        $region25: #{tpu_custom_call.1} parent=11 // pred_check
          %p233 = pneg %p130
        $region26: #{tpu_custom_call.1} parent=11 // pred_check_branch
          %235 = sbr.rel (%p233) target = $region28
        $region27: #{tpu_custom_call.1} parent=11 // pred_region
          _
        $region28: #{tpu_custom_call.1} parent=11 // pred_fallthru
          _
        // Predicated region
        $region29: #{tpu_custom_call.1} parent=11 // pred_check
          %p236 = pneg %p151
        $region30: #{tpu_custom_call.1} parent=11 // pred_check_branch
          %238 = sbr.rel (%p236) target = $region32
        $region31: #{tpu_custom_call.1} parent=11 // pred_region
          %240 = vsyncadd [#allocation6], 0
          %s241 = sshll.u32 %s5, 4
          %s242 = int_to_ptr.hbm [resolvable:$true] %s241
          %s243 = sshll.u32 [#allocation7], 4
          %s244 = int_to_ptr.vmem [resolvable:$true] %s243
          %249 = dma.hbm_to_vmem [thread:$0]  %s242, 512, %s244, [#allocation6], 256, 256, 16
        $region32: #{tpu_custom_call.1} parent=11 // pred_fallthru
          _
        // Predicated region
        $region33: #{tpu_custom_call.1} parent=11 // pred_check
          %p250 = pneg %p172
        $region34: #{tpu_custom_call.1} parent=11 // pred_check_branch
          %252 = sbr.rel (%p250) target = $region36
        $region35: #{tpu_custom_call.1} parent=11 // pred_region
          _
        $region36: #{tpu_custom_call.1} parent=11 // pred_fallthru
          _
      $region12: #{tpu_custom_call.1} parent=5 // pred_fallthru
        _
      %p253 = scmp.lt.s32.totalorder %s20, 2
      // Predicated region
      $region37: #{tpu_custom_call.1} parent=5 // pred_check
        %p254 = pneg %p253
      $region38: #{tpu_custom_call.1} parent=5 // pred_check_branch
        %256 = sbr.rel (%p254) target = $region40
      $region39: #{tpu_custom_call.1} parent=5 // pred_region
        // Predicated region
        $region41: #{tpu_custom_call.1} parent=39 // pred_check
          %p257 = pneg %p40
        $region42: #{tpu_custom_call.1} parent=39 // pred_check_branch
          %259 = sbr.rel (%p257) target = $region44
        $region43: #{tpu_custom_call.1} parent=39 // pred_region
          %s260 = sand.u32 %s30, 1
          %s261 = scalar_lea.sflag [#allocation3], %s260
          %s262 = sand.u32 %s30, 1
          %s263 = smul.addr %s262, 80
          %s264 = scalar_lea.vmem [#allocation2], %s263
          %266 = vsyncadd %s261, 0
          %s267 = smul.addr %s20, 8
          %s268 = scalar_lea.hbm %s0, %s267
          %s269 = sshll.u32 %s268, 4
          %s270 = int_to_ptr.hbm [resolvable:$true] %s269
          %s271 = sshll.u32 %s264, 4
          %s272 = int_to_ptr.vmem [resolvable:$true] %s271
          %277 = dma.hbm_to_vmem [thread:$0]  %s270, 1280, %s272, %s261, 256, 128, 8
        $region44: #{tpu_custom_call.1} parent=39 // pred_fallthru
          _
      $region40: #{tpu_custom_call.1} parent=5 // pred_fallthru
        _
      %p278 = scmp.le.s32.totalorder 1, %s20
      %p279 = scmp.lt.s32.totalorder %s20, 3
      %p280 = pnand %p278, %p279
      %p281 = pneg %p280
      // Predicated region
      $region45: #{tpu_custom_call.1} parent=5 // pred_check
        _
      $region46: #{tpu_custom_call.1} parent=5 // pred_check_branch
        %283 = sbr.rel (%p280) target = $region48
      $region47: #{tpu_custom_call.1} parent=5 // pred_region
        %s284 = ssub.s32 %s20, 1
        %s285 = sand.u32 %s33, 1
        %s286 = scalar_lea.sflag [#allocation3], %s285
        %s287 = sand.u32 %s33, 1
        %s288 = smul.addr %s287, 80
        %s289 = scalar_lea.vmem [#allocation2], %s288
        // Predicated region
        $region49: #{tpu_custom_call.1} parent=47 // pred_check
          %p290 = pneg %p46
        $region50: #{tpu_custom_call.1} parent=47 // pred_check_branch
          %292 = sbr.rel (%p290) target = $region52
        $region51: #{tpu_custom_call.1} parent=47 // pred_region
          %294 = dma.done %s286, 1280
        $region52: #{tpu_custom_call.1} parent=47 // pred_fallthru
          _
        // Predicated region
        $region53: #{tpu_custom_call.1} parent=47 // pred_check
          %p295 = pneg %p67
        $region54: #{tpu_custom_call.1} parent=47 // pred_check_branch
          %297 = sbr.rel (%p295) target = $region56
        $region55: #{tpu_custom_call.1} parent=47 // pred_region
          %299 = dma.done [#allocation6], 256
        $region56: #{tpu_custom_call.1} parent=47 // pred_fallthru
          _
        // Predicated region
        $region57: #{tpu_custom_call.1} parent=47 // pred_check
          %p300 = pneg %p151
        $region58: #{tpu_custom_call.1} parent=47 // pred_check_branch
          %302 = sbr.rel (%p300) target = $region60
        $region59: #{tpu_custom_call.1} parent=47 // pred_region
          %304 = dma.done [#allocation6], 512
        $region60: #{tpu_custom_call.1} parent=47 // pred_fallthru
          _
        %s305 = sand.u32 %s33, 1
        %s306 = scalar_lea.sflag [#allocation3], %s305
        %s307 = sand.u32 %s33, 1
        %s308 = smul.addr %s307, 80
        %s309 = scalar_lea.vmem [#allocation2], %s308
        %p310 = pneg %p46
        %p311 = pneg %p43
        %p312 = pneg %p67
        %p313 = pneg %p64
        %p314 = pneg %p88
        %p315 = pneg %p85
        %p316 = pneg %p109
        %p317 = pneg %p106
        %p318 = pneg %p130
        %p319 = pneg %p127
        %p320 = pneg %p151
        %p321 = pneg %p148
        %p322 = pneg %p172
        %p323 = pneg %p169
        %p324 = pneg %p198
        %p325 = pneg %p195
        %s326 = sand.u32 %s185, 1
        %s327 = scalar_lea.sflag [#allocation4], %s326
        %s328 = sand.u32 %s185, 1
        %s329 = smul.addr %s328, 16
        %s330 = scalar_lea.vmem [#allocation8], %s329
        %v331 = vld [vmem:[%s289] sm:$0xff]
        %v332 = vld [vmem:[%s289 + $0x8] sm:$0xff]
        %v333 = vld [vmem:[%s289 + $0x10] sm:$0xff]
        %v334 = vld [vmem:[%s289 + $0x18] sm:$0xff]
        %v335 = vld [vmem:[%s289 + $0x20] sm:$0xff]
        %v336 = vld [vmem:[%s289 + $0x28] sm:$0xff]
        %v337 = vld [vmem:[%s289 + $0x30] sm:$0xff]
        %v338 = vld [vmem:[%s289 + $0x38] sm:$0xff]
        %v339 = vld [vmem:[%s289 + $0x40] sm:$0xff]
        %v340 = vld [vmem:[%s289 + $0x48] sm:$0xff]
        %v341 = vld [vmem:[#allocation5] sm:$0xff]
        %v342 = vld [vmem:[#allocation5 + $0x8] sm:$0x1f]
        %vm343 = vcmask 105472
        %v345 = vsel %vm343, %v331, 0
        %v348 = vsel %vm343, %v332, 0
        %v351 = vsel %vm343, %v333, 0
        %v354 = vsel %vm343, %v334, 0
        %v357 = vsel %vm343, %v335, 0
        %v360 = vsel %vm343, %v336, 0
        %v363 = vsel %vm343, %v337, 0
        %v366 = vsel %vm343, %v338, 0
        %v369 = vsel %vm343, %v339, 0
        %v372 = vsel %vm343, %v340, 0
        %vm374 = vcmask 1044480
        %v376 = vsel %vm374, %v342, 0
        %378 = vmatpush.msra.mxu0 0.0
        %379 = vmatpush.msra.mxu0 0.0
        %380 = vmatpush.msra.mxu0 0.0
        %381 = vmatpush.msra.mxu0 0.0
        %382 = vmatpush.msra.mxu0 0.0
        %383 = vmatpush.msra.mxu0 0.0
        %384 = vmatpush.msra.mxu0 0.0
        %385 = vmatpush.msra.mxu0 0.0
        %386 = vmatpush.msra.mxu0 0.0
        %387 = vmatpush.msra.mxu0 0.0
        %388 = vmatpush.msra.mxu0 0.0
        %389 = vmatpush.msra.mxu0 0.0
        %390 = vmatpush.msra.mxu0 0.0
        %391 = vmatpush.msra.mxu0 0.0
        %392 = vmatpush.msra.mxu0 %v376
        %393 = vmatpush.msra.mxu0 %v341
        %394 = vmatmul.f32.gmra.mxu0 %v345
        %v395 = vpop.f32.mrf.mxu0
        %v396 = vadd.f32 0.0, %v395
        %397 = vmatmul.f32.gmra.mxu0 %v348
        %v398 = vpop.f32.mrf.mxu0
        %v399 = vadd.f32 0.0, %v398
        %400 = vmatmul.f32.gmra.mxu0 %v351
        %v401 = vpop.f32.mrf.mxu0
        %v402 = vadd.f32 0.0, %v401
        %403 = vmatmul.f32.gmra.mxu0 %v354
        %v404 = vpop.f32.mrf.mxu0
        %v405 = vadd.f32 0.0, %v404
        %406 = vmatmul.f32.gmra.mxu0 %v357
        %v407 = vpop.f32.mrf.mxu0
        %v408 = vadd.f32 0.0, %v407
        %409 = vmatmul.f32.gmra.mxu0 %v360
        %v410 = vpop.f32.mrf.mxu0
        %v411 = vadd.f32 0.0, %v410
        %412 = vmatmul.f32.gmra.mxu0 %v363
        %v413 = vpop.f32.mrf.mxu0
        %v414 = vadd.f32 0.0, %v413
        %415 = vmatmul.f32.gmra.mxu0 %v366
        %v416 = vpop.f32.mrf.mxu0
        %v417 = vadd.f32 0.0, %v416
        %418 = vmatmul.f32.gmra.mxu0 %v369
        %v419 = vpop.f32.mrf.mxu0
        %v420 = vadd.f32 0.0, %v419
        %421 = vmatmul.f32.gmra.mxu0 %v372
        %v422 = vpop.f32.mrf.mxu0
        %v423 = vadd.f32 0.0, %v422
        %424 = vdwg.mxu0
        %v425 = vmul.f32 %v396, 1.442695
        %v426 = vpow.pop %v425
        %v427 = vmul.f32 %v399, 1.442695
        %v428 = vpow.pop %v427
        %v429 = vmul.f32 %v402, 1.442695
        %v430 = vpow.pop %v429
        %v431 = vmul.f32 %v405, 1.442695
        %v432 = vpow.pop %v431
        %v433 = vmul.f32 %v408, 1.442695
        %v434 = vpow.pop %v433
        %v435 = vmul.f32 %v411, 1.442695
        %v436 = vpow.pop %v435
        %v437 = vmul.f32 %v414, 1.442695
        %v438 = vpow.pop %v437
        %v439 = vmul.f32 %v417, 1.442695
        %v440 = vpow.pop %v439
        %v441 = vmul.f32 %v420, 1.442695
        %v442 = vpow.pop %v441
        %v443 = vmul.f32 %v423, 1.442695
        %v444 = vpow.pop %v443
        %v445 = vld [vmem:[%s3] sm:$0x1]
        %v447 = vperm.slane %v445, 0
        %v449 = vadd.f32 %v426, %v447
        %v450 = vadd.f32 %v428, %v447
        %v451 = vadd.f32 %v430, %v447
        %v452 = vadd.f32 %v432, %v447
        %v453 = vadd.f32 %v434, %v447
        %v454 = vadd.f32 %v436, %v447
        %v455 = vadd.f32 %v438, %v447
        %v456 = vadd.f32 %v440, %v447
        %v457 = vadd.f32 %v442, %v447
        %v458 = vadd.f32 %v444, %v447
        %v459 = vlog2.pop %v449
        %v460 = vmul.f32 %v459, 0.6931472
        %v461 = vlog2.pop %v450
        %v462 = vmul.f32 %v461, 0.6931472
        %v463 = vlog2.pop %v451
        %v464 = vmul.f32 %v463, 0.6931472
        %v465 = vlog2.pop %v452
        %v466 = vmul.f32 %v465, 0.6931472
        %v467 = vlog2.pop %v453
        %v468 = vmul.f32 %v467, 0.6931472
        %v469 = vlog2.pop %v454
        %v470 = vmul.f32 %v469, 0.6931472
        %v471 = vlog2.pop %v455
        %v472 = vmul.f32 %v471, 0.6931472
        %v473 = vlog2.pop %v456
        %v474 = vmul.f32 %v473, 0.6931472
        %v475 = vlog2.pop %v457
        %v476 = vmul.f32 %v475, 0.6931472
        %v477 = vlog2.pop %v458
        %v478 = vmul.f32 %v477, 0.6931472
        %v479 = vld [vmem:[%s2] sm:$0xff]
        %v480 = vld [vmem:[%s2 + $0x8] sm:$0xff]
        %v481 = vld [vmem:[%s2 + $0x10] sm:$0xff]
        %vm482 = vcmask 195584
        %v484 = vsel %vm482, %v460, 0
        %v487 = vsel %vm482, %v462, 0
        %v490 = vsel %vm482, %v464, 0
        %v493 = vsel %vm482, %v466, 0
        %v496 = vsel %vm482, %v468, 0
        %v499 = vsel %vm482, %v470, 0
        %v502 = vsel %vm482, %v472, 0
        %v505 = vsel %vm482, %v474, 0
        %v508 = vsel %vm482, %v476, 0
        %v511 = vsel %vm482, %v478, 0
        %513 = vmatpush.msra.mxu0 0.0
        %514 = vmatpush.msra.mxu0 0.0
        %515 = vmatpush.msra.mxu0 0.0
        %516 = vmatpush.msra.mxu0 0.0
        %517 = vmatpush.msra.mxu0 0.0
        %518 = vmatpush.msra.mxu0 0.0
        %519 = vmatpush.msra.mxu0 0.0
        %520 = vmatpush.msra.mxu0 0.0
        %521 = vmatpush.msra.mxu0 0.0
        %522 = vmatpush.msra.mxu0 0.0
        %523 = vmatpush.msra.mxu0 0.0
        %524 = vmatpush.msra.mxu0 0.0
        %525 = vmatpush.msra.mxu0 0.0
        %526 = vmatpush.msra.mxu0 %v481
        %527 = vmatpush.msra.mxu0 %v480
        %528 = vmatpush.msra.mxu0 %v479
        %529 = vmatmul.f32.gmra.mxu0 %v484
        %v530 = vpop.f32.mrf.mxu0
        %v531 = vadd.f32 0.0, %v530
        %532 = vmatmul.f32.gmra.mxu0 %v487
        %v533 = vpop.f32.mrf.mxu0
        %v534 = vadd.f32 0.0, %v533
        %535 = vmatmul.f32.gmra.mxu0 %v490
        %v536 = vpop.f32.mrf.mxu0
        %v537 = vadd.f32 0.0, %v536
        %538 = vmatmul.f32.gmra.mxu0 %v493
        %v539 = vpop.f32.mrf.mxu0
        %v540 = vadd.f32 0.0, %v539
        %541 = vmatmul.f32.gmra.mxu0 %v496
        %v542 = vpop.f32.mrf.mxu0
        %v543 = vadd.f32 0.0, %v542
        %544 = vmatmul.f32.gmra.mxu0 %v499
        %v545 = vpop.f32.mrf.mxu0
        %v546 = vadd.f32 0.0, %v545
        %547 = vmatmul.f32.gmra.mxu0 %v502
        %v548 = vpop.f32.mrf.mxu0
        %v549 = vadd.f32 0.0, %v548
        %550 = vmatmul.f32.gmra.mxu0 %v505
        %v551 = vpop.f32.mrf.mxu0
        %v552 = vadd.f32 0.0, %v551
        %553 = vmatmul.f32.gmra.mxu0 %v508
        %v554 = vpop.f32.mrf.mxu0
        %v555 = vadd.f32 0.0, %v554
        %556 = vmatmul.f32.gmra.mxu0 %v511
        %v557 = vpop.f32.mrf.mxu0
        %v558 = vadd.f32 0.0, %v557
        %559 = vdwg.mxu0
        %v560 = vld [vmem:[%s4] sm:$0xff]
        %v561 = vld [vmem:[%s4 + $0x8] sm:$0xff]
        %v562 = vld [vmem:[%s4 + $0x10] sm:$0x1f]
        %v563 = vld [vmem:[%s4 + $0x18] sm:$0x1f]
        %v565 = vsel %vm343, %v531, 0
        %v568 = vsel %vm343, %v534, 0
        %v571 = vsel %vm343, %v537, 0
        %v574 = vsel %vm343, %v540, 0
        %v577 = vsel %vm343, %v543, 0
        %v580 = vsel %vm343, %v546, 0
        %v583 = vsel %vm343, %v549, 0
        %v586 = vsel %vm343, %v552, 0
        %v589 = vsel %vm343, %v555, 0
        %v592 = vsel %vm343, %v558, 0
        %v595 = vsel %vm374, %v562, 0
        %v598 = vsel %vm374, %v563, 0
        %600 = vmatpush.msra.mxu0 0.0
        %601 = vmatpush.msra.mxu0 0.0
        %602 = vmatpush.msra.mxu0 0.0
        %603 = vmatpush.msra.mxu0 0.0
        %604 = vmatpush.msra.mxu0 0.0
        %605 = vmatpush.msra.mxu0 0.0
        %606 = vmatpush.msra.mxu0 0.0
        %607 = vmatpush.msra.mxu0 0.0
        %608 = vmatpush.msra.mxu0 0.0
        %609 = vmatpush.msra.mxu0 0.0
        %610 = vmatpush.msra.mxu0 0.0
        %611 = vmatpush.msra.mxu0 0.0
        %612 = vmatpush.msra.mxu0 0.0
        %613 = vmatpush.msra.mxu0 0.0
        %614 = vmatpush.msra.mxu0 %v595
        %615 = vmatpush.msra.mxu0 %v560
        %616 = vmatmul.f32.gmra.mxu0 %v565
        %v617 = vpop.f32.mrf.mxu0
        %v618 = vadd.f32 0.0, %v617
        %619 = vmatmul.f32.gmra.mxu0 %v568
        %v620 = vpop.f32.mrf.mxu0
        %v621 = vadd.f32 0.0, %v620
        %622 = vmatmul.f32.gmra.mxu0 %v571
        %v623 = vpop.f32.mrf.mxu0
        %v624 = vadd.f32 0.0, %v623
        %625 = vmatmul.f32.gmra.mxu0 %v574
        %v626 = vpop.f32.mrf.mxu0
        %v627 = vadd.f32 0.0, %v626
        %628 = vmatmul.f32.gmra.mxu0 %v577
        %v629 = vpop.f32.mrf.mxu0
        %v630 = vadd.f32 0.0, %v629
        %631 = vmatmul.f32.gmra.mxu0 %v580
        %v632 = vpop.f32.mrf.mxu0
        %v633 = vadd.f32 0.0, %v632
        %634 = vmatmul.f32.gmra.mxu0 %v583
        %v635 = vpop.f32.mrf.mxu0
        %v636 = vadd.f32 0.0, %v635
        %637 = vmatmul.f32.gmra.mxu0 %v586
        %v638 = vpop.f32.mrf.mxu0
        %v639 = vadd.f32 0.0, %v638
        %640 = vmatmul.f32.gmra.mxu0 %v589
        %v641 = vpop.f32.mrf.mxu0
        %v642 = vadd.f32 0.0, %v641
        %643 = vmatmul.f32.gmra.mxu0 %v592
        %v644 = vpop.f32.mrf.mxu0
        %v645 = vadd.f32 0.0, %v644
        %646 = vdwg.mxu0
        %647 = vmatpush.msra.mxu0 0.0
        %648 = vmatpush.msra.mxu0 0.0
        %649 = vmatpush.msra.mxu0 0.0
        %650 = vmatpush.msra.mxu0 0.0
        %651 = vmatpush.msra.mxu0 0.0
        %652 = vmatpush.msra.mxu0 0.0
        %653 = vmatpush.msra.mxu0 0.0
        %654 = vmatpush.msra.mxu0 0.0
        %655 = vmatpush.msra.mxu0 0.0
        %656 = vmatpush.msra.mxu0 0.0
        %657 = vmatpush.msra.mxu0 0.0
        %658 = vmatpush.msra.mxu0 0.0
        %659 = vmatpush.msra.mxu0 0.0
        %660 = vmatpush.msra.mxu0 0.0
        %661 = vmatpush.msra.mxu0 %v598
        %662 = vmatpush.msra.mxu0 %v561
        %663 = vmatmul.f32.gmra.mxu0 %v565
        %v664 = vpop.f32.mrf.mxu0
        %v665 = vadd.f32 0.0, %v664
        %666 = vmatmul.f32.gmra.mxu0 %v568
        %v667 = vpop.f32.mrf.mxu0
        %v668 = vadd.f32 0.0, %v667
        %669 = vmatmul.f32.gmra.mxu0 %v571
        %v670 = vpop.f32.mrf.mxu0
        %v671 = vadd.f32 0.0, %v670
        %672 = vmatmul.f32.gmra.mxu0 %v574
        %v673 = vpop.f32.mrf.mxu0
        %v674 = vadd.f32 0.0, %v673
        %675 = vmatmul.f32.gmra.mxu0 %v577
        %v676 = vpop.f32.mrf.mxu0
        %v677 = vadd.f32 0.0, %v676
        %678 = vmatmul.f32.gmra.mxu0 %v580
        %v679 = vpop.f32.mrf.mxu0
        %v680 = vadd.f32 0.0, %v679
        %681 = vmatmul.f32.gmra.mxu0 %v583
        %v682 = vpop.f32.mrf.mxu0
        %v683 = vadd.f32 0.0, %v682
        %684 = vmatmul.f32.gmra.mxu0 %v586
        %v685 = vpop.f32.mrf.mxu0
        %v686 = vadd.f32 0.0, %v685
        %687 = vmatmul.f32.gmra.mxu0 %v589
        %v688 = vpop.f32.mrf.mxu0
        %v689 = vadd.f32 0.0, %v688
        %690 = vmatmul.f32.gmra.mxu0 %v592
        %v691 = vpop.f32.mrf.mxu0
        %v692 = vadd.f32 0.0, %v691
        %693 = vdwg.mxu0
        %v694 = vld [vmem:[#allocation7] sm:$0xff]
        %v695 = vld [vmem:[#allocation7 + $0x8] sm:$0xff]
        %v696 = vld [vmem:[#allocation7 + $0x10] sm:$0x1f]
        %v697 = vld [vmem:[#allocation7 + $0x18] sm:$0x1f]
        %v698 = vld [vmem:[%s6] sm:$0x3]
        %v700 = vperm.slane %v698, 0
        %v701 = vperm.slane %v698, 1
        %v705 = vsel %vm374, %v696, 0
        %v708 = vsel %vm374, %v697, 0
        %710 = vmatpush.msra.mxu0 0.0
        %711 = vmatpush.msra.mxu0 0.0
        %712 = vmatpush.msra.mxu0 0.0
        %713 = vmatpush.msra.mxu0 0.0
        %714 = vmatpush.msra.mxu0 0.0
        %715 = vmatpush.msra.mxu0 0.0
        %716 = vmatpush.msra.mxu0 0.0
        %717 = vmatpush.msra.mxu0 0.0
        %718 = vmatpush.msra.mxu0 0.0
        %719 = vmatpush.msra.mxu0 0.0
        %720 = vmatpush.msra.mxu0 0.0
        %721 = vmatpush.msra.mxu0 0.0
        %722 = vmatpush.msra.mxu0 0.0
        %723 = vmatpush.msra.mxu0 0.0
        %724 = vmatpush.msra.mxu0 %v705
        %725 = vmatpush.msra.mxu0 %v694
        %726 = vmatmul.f32.gmra.mxu0 %v565
        %v727 = vpop.f32.mrf.mxu0
        %v728 = vadd.f32 %v700, %v727
        %729 = vmatmul.f32.gmra.mxu0 %v568
        %v730 = vpop.f32.mrf.mxu0
        %v731 = vadd.f32 %v700, %v730
        %732 = vmatmul.f32.gmra.mxu0 %v571
        %v733 = vpop.f32.mrf.mxu0
        %v734 = vadd.f32 %v700, %v733
        %735 = vmatmul.f32.gmra.mxu0 %v574
        %v736 = vpop.f32.mrf.mxu0
        %v737 = vadd.f32 %v700, %v736
        %738 = vmatmul.f32.gmra.mxu0 %v577
        %v739 = vpop.f32.mrf.mxu0
        %v740 = vadd.f32 %v700, %v739
        %741 = vmatmul.f32.gmra.mxu0 %v580
        %v742 = vpop.f32.mrf.mxu0
        %v743 = vadd.f32 %v700, %v742
        %744 = vmatmul.f32.gmra.mxu0 %v583
        %v745 = vpop.f32.mrf.mxu0
        %v746 = vadd.f32 %v700, %v745
        %747 = vmatmul.f32.gmra.mxu0 %v586
        %v748 = vpop.f32.mrf.mxu0
        %v749 = vadd.f32 %v700, %v748
        %750 = vmatmul.f32.gmra.mxu0 %v589
        %v751 = vpop.f32.mrf.mxu0
        %v752 = vadd.f32 %v700, %v751
        %753 = vmatmul.f32.gmra.mxu0 %v592
        %v754 = vpop.f32.mrf.mxu0
        %v755 = vadd.f32 %v700, %v754
        %756 = vdwg.mxu0
        %757 = vmatpush.msra.mxu0 0.0
        %758 = vmatpush.msra.mxu0 0.0
        %759 = vmatpush.msra.mxu0 0.0
        %760 = vmatpush.msra.mxu0 0.0
        %761 = vmatpush.msra.mxu0 0.0
        %762 = vmatpush.msra.mxu0 0.0
        %763 = vmatpush.msra.mxu0 0.0
        %764 = vmatpush.msra.mxu0 0.0
        %765 = vmatpush.msra.mxu0 0.0
        %766 = vmatpush.msra.mxu0 0.0
        %767 = vmatpush.msra.mxu0 0.0
        %768 = vmatpush.msra.mxu0 0.0
        %769 = vmatpush.msra.mxu0 0.0
        %770 = vmatpush.msra.mxu0 0.0
        %771 = vmatpush.msra.mxu0 %v708
        %772 = vmatpush.msra.mxu0 %v695
        %773 = vmatmul.f32.gmra.mxu0 %v565
        %v774 = vpop.f32.mrf.mxu0
        %v775 = vadd.f32 %v701, %v774
        %776 = vmatmul.f32.gmra.mxu0 %v568
        %v777 = vpop.f32.mrf.mxu0
        %v778 = vadd.f32 %v701, %v777
        %779 = vmatmul.f32.gmra.mxu0 %v571
        %v780 = vpop.f32.mrf.mxu0
        %v781 = vadd.f32 %v701, %v780
        %782 = vmatmul.f32.gmra.mxu0 %v574
        %v783 = vpop.f32.mrf.mxu0
        %v784 = vadd.f32 %v701, %v783
        %785 = vmatmul.f32.gmra.mxu0 %v577
        %v786 = vpop.f32.mrf.mxu0
        %v787 = vadd.f32 %v701, %v786
        %788 = vmatmul.f32.gmra.mxu0 %v580
        %v789 = vpop.f32.mrf.mxu0
        %v790 = vadd.f32 %v701, %v789
        %791 = vmatmul.f32.gmra.mxu0 %v583
        %v792 = vpop.f32.mrf.mxu0
        %v793 = vadd.f32 %v701, %v792
        %794 = vmatmul.f32.gmra.mxu0 %v586
        %v795 = vpop.f32.mrf.mxu0
        %v796 = vadd.f32 %v701, %v795
        %797 = vmatmul.f32.gmra.mxu0 %v589
        %v798 = vpop.f32.mrf.mxu0
        %v799 = vadd.f32 %v701, %v798
        %800 = vmatmul.f32.gmra.mxu0 %v592
        %v801 = vpop.f32.mrf.mxu0
        %v802 = vadd.f32 %v701, %v801
        %803 = vdwg.mxu0
        %v804 = vmul.f32 %v618, %v728
        %v805 = vmul.f32 %v665, %v775
        %v806 = vmul.f32 %v621, %v731
        %v807 = vmul.f32 %v668, %v778
        %v808 = vmul.f32 %v624, %v734
        %v809 = vmul.f32 %v671, %v781
        %v810 = vmul.f32 %v627, %v737
        %v811 = vmul.f32 %v674, %v784
        %v812 = vmul.f32 %v630, %v740
        %v813 = vmul.f32 %v677, %v787
        %v814 = vmul.f32 %v633, %v743
        %v815 = vmul.f32 %v680, %v790
        %v816 = vmul.f32 %v636, %v746
        %v817 = vmul.f32 %v683, %v793
        %v818 = vmul.f32 %v639, %v749
        %v819 = vmul.f32 %v686, %v796
        %v820 = vmul.f32 %v642, %v752
        %v821 = vmul.f32 %v689, %v799
        %v822 = vmul.f32 %v645, %v755
        %v823 = vmul.f32 %v692, %v802
        %v824 = vadd.f32 %v804, %v806
        %v825 = vadd.f32 %v824, %v808
        %v826 = vadd.f32 %v825, %v810
        %v827 = vadd.f32 %v826, %v812
        %v828 = vadd.f32 %v827, %v814
        %v829 = vadd.f32 %v828, %v816
        %v830 = vadd.f32 %v829, %v818
        %v831 = vadd.f32 %v830, %v820
        %v832 = vadd.f32 %v831, %v822
        %v833 = vadd.f32 %v805, %v807
        %v834 = vadd.f32 %v833, %v809
        %v835 = vadd.f32 %v834, %v811
        %v836 = vadd.f32 %v835, %v813
        %v837 = vadd.f32 %v836, %v815
        %v838 = vadd.f32 %v837, %v817
        %v839 = vadd.f32 %v838, %v819
        %v840 = vadd.f32 %v839, %v821
        %v841 = vadd.f32 %v840, %v823
        %v842 = vrcp.pop 10.0
        %v843 = vmul.f32 10.0, %v842
        %v844 = vsub.f32 1.0, %v843
        %v845 = vmul.f32 %v842, %v844
        %v846 = vadd.f32 %v842, %v845
        %vm847 = vweird.f32 %v842
        %v848 = vsel %vm847, %v842, %v846
        %v849 = vmul.f32 %v832, %v848
        %v850 = vmul.f32 %v841, %v848
        %851 = vst [vmem:[%s330] sm:$0xff] %v849
        %852 = vst [vmem:[%s330 + $0x8] sm:$0xff] %v850
        %s853 = sand.u32 %s185, 1
        %s854 = scalar_lea.sflag [#allocation4], %s853
        %s855 = sand.u32 %s185, 1
        %s856 = smul.addr %s855, 16
        %s857 = scalar_lea.vmem [#allocation8], %s856
        // Predicated region
        $region61: #{tpu_custom_call.1} parent=47 // pred_check
          %p858 = pneg %p195
        $region62: #{tpu_custom_call.1} parent=47 // pred_check_branch
          %860 = sbr.rel (%p858) target = $region64
        $region63: #{tpu_custom_call.1} parent=47 // pred_region
          %862 = vsyncadd %s854, 0
          %s863 = smul.addr %s25, 2
          %s864 = smul.addr %s863, 8
          %s865 = scalar_lea.hbm %s7, %s864
          %s867 = sshll.u32 %s857, 4
          %s868 = int_to_ptr.vmem [resolvable:$true] %s867
          %s869 = sshll.u32 %s865, 4
          %s870 = int_to_ptr.hbm [resolvable:$true] %s869
          %872 = dma.vmem_to_hbm [thread:$0]  %s868, 256, %s870, %s854
        $region64: #{tpu_custom_call.1} parent=47 // pred_fallthru
          _
      $region48: #{tpu_custom_call.1} parent=5 // pred_fallthru
        _
      %p873 = scmp.le.s32.totalorder 2, %s20
      // Predicated region
      $region65: #{tpu_custom_call.1} parent=5 // pred_check
        %p874 = pneg %p873
      $region66: #{tpu_custom_call.1} parent=5 // pred_check_branch
        %876 = sbr.rel (%p874) target = $region68
      $region67: #{tpu_custom_call.1} parent=5 // pred_region
        %s877 = ssub.s32 %s20, 2
        // Predicated region
        $region69: #{tpu_custom_call.1} parent=67 // pred_check
          %p878 = pneg %p201
        $region70: #{tpu_custom_call.1} parent=67 // pred_check_branch
          %880 = sbr.rel (%p878) target = $region72
        $region71: #{tpu_custom_call.1} parent=67 // pred_region
          %s881 = sand.u32 %s186, 1
          %s882 = scalar_lea.sflag [#allocation4], %s881
          %s883 = sand.u32 %s186, 1
          %s884 = smul.addr %s883, 16
          %s885 = scalar_lea.vmem [#allocation8], %s884
          %887 = dma.done %s882, 256
        $region72: #{tpu_custom_call.1} parent=67 // pred_fallthru
          _
      $region68: #{tpu_custom_call.1} parent=5 // pred_fallthru
        _
    $region6: #{tpu_custom_call.1} parent=1 // loop_footer
      %s24 = sadd.s32 1, %s20
    $region7: #{tpu_custom_call.1} parent=1 // loop_footer_branch
      %19 = sbr.rel target = $region3
    $region8: #{tpu_custom_call.1} parent=1 // loop_exit
      _
    %888 = vsyncpa [#allocation3], 1
    %s889 = scalar_lea.sflag [#allocation3], 1
    %890 = vsyncpa %s889, 1
    %891 = vsyncpa [#allocation6], 1
    %892 = vsyncpa [#allocation4], 1
    %s893 = scalar_lea.sflag [#allocation4], 1
    %894 = vsyncpa %s893, 1

</llo_original>
